<compile_context>
chip_gen: v7x
topology: tpu7x:2x2x1
jax: 0.10.0
libtpu: 0.0.40
codegen_flags: <defaults>
</compile_context>

<pallas_src>
import jax
import jax.numpy as jnp
from jax.experimental import pallas as pl
from jax.experimental.pallas import tpu as pltpu

_BN_EPS = 1e-5          # PyTorch BatchNorm2d default eps
_LRELU_SLOPE = 0.2      # LeakyReLU slope used by the discriminator
_KW = 4                 # conv kernel size


def _full_block(shape):
    """BlockSpec covering the whole array (single-step grid)."""
    shape = tuple(int(s) for s in shape)
    return pl.BlockSpec(shape, lambda i: (0,) * len(shape))


def _pick_m_tile(m):
    """Largest nice divisor of m for M-tiling (falls back to the full extent)."""
    for cand in (1024, 512, 256, 128):
        if m % cand == 0:
            return cand
    return m


# ---------------------------------------------------------------------------
# Kernel A: fused matmul + bias (+ LeakyReLU) for the im2col'd first layer.
# bf16 operands on the MXU, f32 accumulation, bf16 store.
# ---------------------------------------------------------------------------
def _make_matmul_kernel(act_slope):
    def kernel(x_ref, w_ref, b_ref, o_ref):
        acc = jnp.dot(x_ref[...], w_ref[...],
                      preferred_element_type=jnp.float32)
        acc = acc + b_ref[...]
        if act_slope is not None:
            acc = jnp.where(acc >= 0.0, acc, act_slope * acc)
        o_ref[...] = acc.astype(o_ref.dtype)
    return kernel


def _im2col_matmul_layer(x_nhwc, p):
    """Layer 1: Conv4x4 stride-2 with tiny Cin as a single K=16*Cin matmul."""
    w, b, act_slope = p["w"], p.get("b"), p["act_slope"]
    B, H, W, C = x_nhwc.shape
    Cout = w.shape[-1]
    ho = (H + 2 - _KW) // 2 + 1
    wo = (W + 2 - _KW) // 2 + 1

    xp = jnp.pad(x_nhwc, ((0, 0), (1, 1), (1, 1), (0, 0)))
    # im2col: patches[b, i, j, (ky*4+kx)*C + c] = xp[b, 2i+ky, 2j+kx, c]
    cols = [xp[:, ky:ky + 2 * ho:2, kx:kx + 2 * wo:2, :]
            for ky in range(_KW) for kx in range(_KW)]
    patches = (jnp.concatenate(cols, axis=-1)
               .reshape(B * ho * wo, _KW * _KW * C)
               .astype(jnp.bfloat16))

    w2 = w.reshape(_KW * _KW * C, Cout).astype(jnp.bfloat16)
    b1 = b if b is not None else jnp.zeros((Cout,), jnp.float32)
    b2 = b1.astype(jnp.float32).reshape(1, Cout)

    M, K = patches.shape
    tm = _pick_m_tile(M)

    out = pl.pallas_call(
        _make_matmul_kernel(act_slope),
        out_shape=jax.ShapeDtypeStruct((M, Cout), jnp.bfloat16),
        grid_spec=pltpu.PrefetchScalarGridSpec(
            num_scalar_prefetch=0,
            grid=(M // tm,),
            in_specs=[pl.BlockSpec((tm, K), lambda i: (i, 0)),
                      pl.BlockSpec((K, Cout), lambda i: (0, 0)),
                      pl.BlockSpec((1, Cout), lambda i: (0, 0))],
            out_specs=pl.BlockSpec((tm, Cout), lambda i: (i, 0))),
        compiler_params=pltpu.CompilerParams(
            dimension_semantics=("parallel",)),
    )(patches, w2, b2)
    return out.reshape(B, ho, wo, Cout)


# ---------------------------------------------------------------------------
# Kernel B: fused Conv4x4(+bias) [+BatchNorm(batch stats)] [+LeakyReLU].
# kx taps are pre-folded into the channel/contraction dim, so the kernel only
# slices leading dims (no sublane relayouts) and does 4 K=4*Cin matmuls.
# ---------------------------------------------------------------------------
def _make_conv4x4_kernel(*, stride, batch, ho, wo, cin, cout, use_norm,
                         act_slope):
    hw = batch * ho * wo
    kc = _KW * cin      # contraction dim with the 4 kx taps folded in

    def kernel(x_ref, w_ref, b_ref, g_ref, bt_ref, o_ref):
        # stride == 2: x_ref (2*B, hop, wo, 4*Cin) -- row-phase major, column
        #              phase + column offset folded into channels (kx-major).
        # stride == 1: x_ref (B, H+2, wo, 4*Cin)   -- kx folded into channels.
        acc = None
        for ky in range(_KW):
            if stride == 2:
                py, oy = ky % 2, ky // 2
                slab = x_ref[py * batch:(py + 1) * batch, oy:oy + ho, :, :]
            else:
                slab = x_ref[:, ky:ky + ho, :, :]
            part = jnp.dot(slab.reshape(hw, kc), w_ref[ky],
                           preferred_element_type=jnp.float32)
            acc = part if acc is None else acc + part

        acc = acc + b_ref[...]                       # (1, Cout) broadcast, f32

        if use_norm:
            # BatchNorm2d training-mode forward, one-pass statistics:
            # per-channel sum / sum-of-squares, biased variance, eps=1e-5.
            inv_n = 1.0 / hw
            mean = jnp.sum(acc, axis=0, keepdims=True) * inv_n
            ex2 = jnp.sum(acc * acc, axis=0, keepdims=True) * inv_n
            var = jnp.maximum(ex2 - mean * mean, 0.0)
            scale = jax.lax.rsqrt(var + _BN_EPS) * g_ref[...]
            acc = (acc - mean) * scale + bt_ref[...]

        if act_slope is not None:                    # LeakyReLU(0.2)
            acc = jnp.where(acc >= 0.0, acc, act_slope * acc)

        o_ref[...] = acc.reshape(batch, ho, wo, cout).astype(o_ref.dtype)

    return kernel


def _conv_layer(x_nhwc, p):
    """One discriminator layer: Conv2d(4x4, pad=1, stride) [+BN] [+LeakyReLU]."""
    w, b = p["w"], p.get("b")
    gamma, beta = p.get("gamma"), p.get("beta")
    stride, use_norm, act_slope = p["stride"], p["use_norm"], p["act_slope"]

    B, H, W, C = x_nhwc.shape
    Cout = w.shape[-1]

    # Lane-sparse outputs (the final Cout=1 conv) are padded to a dense
    # 128-lane slab; the extra channels are sliced off after the call.
    Cout_p = 128 if Cout < 8 else Cout
    if Cout_p != Cout:
        w = jnp.pad(w, ((0, 0), (0, 0), (0, 0), (0, Cout_p - Cout)))
        if b is not None:
            b = jnp.pad(b, (0, Cout_p - Cout))
        if gamma is not None:
            gamma = jnp.pad(gamma, (0, Cout_p - Cout), constant_values=1.0)
        if beta is not None:
            beta = jnp.pad(beta, (0, Cout_p - Cout))

    if stride == 2:
        ho = (H + 2 - _KW) // 2 + 1
        wo = (W + 2 - _KW) // 2 + 1
        hp, wp = H + 2, W + 2
        # Zero-pad by 1 (conv padding), then up to even so the 2x2 phase
        # decomposition is exact (extra row/col never read by any tap).
        xp = jnp.pad(x_nhwc, ((0, 0), (1, 1 + hp % 2), (1, 1 + wp % 2), (0, 0)))
        hop, wop = (hp + hp % 2) // 2, (wp + wp % 2) // 2
        # Row-phase split with the column phase folded into channels (a single
        # reshape/transpose): xr[py*B+b, i, j, px*C+c] = xp[b, 2i+py, 2j+px, c]
        xr = (xp.reshape(B, hop, 2, wop, 2, C)
                .transpose(2, 0, 1, 3, 4, 5)
                .reshape(2 * B, hop, wop, 2 * C))
        # Fold the column offset ox in {0,1} too: channel order becomes
        # kx = 2*ox + px, each C wide -> K = 4*C for the kernel matmuls.
        x_in = jnp.concatenate([xr[:, :, 0:wo, :], xr[:, :, 1:1 + wo, :]],
                               axis=-1)
    else:
        ho, wo = H - 1, W - 1
        xp = jnp.pad(x_nhwc, ((0, 0), (1, 1), (1, 1), (0, 0)))
        # Fold kx into channels: x_in[b, h, j, kx*C + c] = xp[b, h, j+kx, c].
        x_in = jnp.concatenate(
            [xp[:, :, kx:kx + wo, :] for kx in range(_KW)], axis=-1)

    x_in = x_in.astype(jnp.bfloat16)
    # w4[ky][kx*C + c, co] = w[ky, kx, c, co]  (matches the kx-major fold above)
    w4 = w.reshape(_KW, _KW * C, Cout_p).astype(jnp.bfloat16)

    zeros = jnp.zeros((Cout_p,), jnp.float32)
    ones = jnp.ones((Cout_p,), jnp.float32)
    b2 = (b.astype(jnp.float32) if b is not None else zeros).reshape(1, Cout_p)
    g2 = (gamma.astype(jnp.float32) if gamma is not None else ones).reshape(1, Cout_p)
    bt2 = (beta.astype(jnp.float32) if beta is not None else zeros).reshape(1, Cout_p)

    kernel = _make_conv4x4_kernel(stride=stride, batch=B, ho=ho, wo=wo,
                                  cin=C, cout=Cout_p, use_norm=use_norm,
                                  act_slope=act_slope)

    args = (x_in, w4, b2, g2, bt2)
    out_shape = (B, ho, wo, Cout_p)

    out = pl.pallas_call(
        kernel,
        out_shape=jax.ShapeDtypeStruct(out_shape, jnp.bfloat16),
        grid_spec=pltpu.PrefetchScalarGridSpec(
            num_scalar_prefetch=0,
            # Single grid step: BatchNorm batch statistics need the whole
            # (B, Ho, Wo) slab resident.  Fine at these sizes; see the TODO at
            # the top for the production-size tiled / two-pass variant.
            grid=(1,),
            in_specs=[_full_block(a.shape) for a in args],
            out_specs=_full_block(out_shape)),
        compiler_params=pltpu.CompilerParams(
            dimension_semantics=("arbitrary",)),
    )(*args)

    if Cout_p != Cout:
        out = out[..., :Cout]
    return out


def nlayer_discriminator_forward(x_nchw, params):
    """NLayerDiscriminator forward. x_nchw: (B, input_nc, H, W) float32.

    Returns the PatchGAN map (B, 1, H', W') in float32.  Internally NHWC and
    bf16 end-to-end; the only layout transposes are at this boundary.
    """
    x = jnp.transpose(x_nchw, (0, 2, 3, 1)).astype(jnp.bfloat16)   # -> NHWC bf16
    for p in params:
        cin = p["w"].shape[2]
        if p["stride"] == 2 and not p["use_norm"] and cin <= 8:
            x = _im2col_matmul_layer(x, p)           # layer 1: K=16*Cin matmul
        else:
            x = _conv_layer(x, p)                    # fused conv(+BN)(+LReLU)
    return jnp.transpose(x, (0, 3, 1, 2)).astype(jnp.float32)      # -> NCHW f32


def init_nlayer_discriminator_params(key, input_nc, ndf=64, n_layers=3):
    """Mirror the PyTorch constructor (norm_layer=BatchNorm2d => use_bias=False)."""
    cfgs = [dict(cin=input_nc, cout=ndf, stride=2, norm=False, bias=True,
                 act=_LRELU_SLOPE)]
    nf = 1
    for n in range(1, n_layers):
        nf_prev, nf = nf, min(2 ** n, 8)
        cfgs.append(dict(cin=ndf * nf_prev, cout=ndf * nf, stride=2, norm=True,
                         bias=False, act=_LRELU_SLOPE))
    nf_prev, nf = nf, min(2 ** n_layers, 8)
    cfgs.append(dict(cin=ndf * nf_prev, cout=ndf * nf, stride=1, norm=True,
                     bias=False, act=_LRELU_SLOPE))
    cfgs.append(dict(cin=ndf * nf, cout=1, stride=1, norm=False, bias=True,
                     act=None))

    params = []
    for cfg in cfgs:
        key, kw, kb = jax.random.split(key, 3)
        p = dict(
            w=0.05 * jax.random.normal(kw, (_KW, _KW, cfg["cin"], cfg["cout"]),
                                       dtype=jnp.float32),   # HWIO layout
            stride=cfg["stride"], use_norm=cfg["norm"], act_slope=cfg["act"],
        )
        if cfg["bias"]:
            p["b"] = 0.05 * jax.random.normal(kb, (cfg["cout"],), jnp.float32)
        if cfg["norm"]:
            p["gamma"] = jnp.ones((cfg["cout"],), jnp.float32)   # PyTorch init
            p["beta"] = jnp.zeros((cfg["cout"],), jnp.float32)
        params.append(p)
    return params


if __name__ == "__main__":
    # Small shapes consistent with the module: batch=2, RGB input, ndf=16,
    # n_layers=3, 32x32 spatial (spatial path: 32 -> 16 -> 8 -> 4 -> 3 -> 2).
    B, C_IN, H, W = 2, 3, 32, 32
    NDF, N_LAYERS = 16, 3

    key = jax.random.PRNGKey(0)
    kx, kp = jax.random.split(key)
    x = jax.random.normal(kx, (B, C_IN, H, W), dtype=jnp.float32)
    params = init_nlayer_discriminator_params(kp, C_IN, ndf=NDF, n_layers=N_LAYERS)

    out = nlayer_discriminator_forward(x, params)
    jax.block_until_ready(out)

    assert out.shape == (B, 1, 2, 2), out.shape
    assert out.dtype == jnp.float32
    print("KERNEL_OK")
</pallas_src>

<mosaic_0001>
module attributes {stable_mosaic.version = 11 : i64} {
  func.func @kernel(%arg0: i32, %arg1: memref<512x48xbf16, #tpu.memory_space<vmem>>, %arg2: memref<48x16xbf16, #tpu.memory_space<vmem>>, %arg3: memref<1x16xf32, #tpu.memory_space<vmem>>, %arg4: memref<512x16xbf16, #tpu.memory_space<vmem>>) attributes {dimension_semantics = [#tpu.dimension_semantics<parallel>], iteration_bounds = array<i64: 1>, scalar_prefetch = 0 : i64, scratch_operands = 0 : i64, tpu.core_type = #tpu.core_type<tc>, window_params = [{transform_indices = @transform_0, window_bounds = array<i64: 512, 48>}, {pipeline_mode = #tpu.pipeline_mode<synchronous>, transform_indices = @transform_1, window_bounds = array<i64: 48, 16>}, {pipeline_mode = #tpu.pipeline_mode<synchronous>, transform_indices = @transform_2, window_bounds = array<i64: 1, 16>}, {transform_indices = @transform_3, window_bounds = array<i64: 512, 16>}]} {
    %c0 = arith.constant 0 : index
    %c0_0 = arith.constant 0 : index
    %0 = vector.load %arg1[%c0, %c0_0] : memref<512x48xbf16, #tpu.memory_space<vmem>>, vector<512x48xbf16>
    %c0_1 = arith.constant 0 : index
    %c0_2 = arith.constant 0 : index
    %1 = vector.load %arg2[%c0_1, %c0_2] : memref<48x16xbf16, #tpu.memory_space<vmem>>, vector<48x16xbf16>
    %cst = arith.constant dense<0.000000e+00> : vector<512x16xf32>
    %2 = tpu.matmul %0, %1, %cst {dimension_numbers = #tpu.dot_dimension_numbers<[1], [0], [0], [1], [0, 0, 1, 1], [], []>} : vector<512x48xbf16>, vector<48x16xbf16>, vector<512x16xf32> -> vector<512x16xf32>
    %c0_3 = arith.constant 0 : index
    %c0_4 = arith.constant 0 : index
    %3 = vector.load %arg3[%c0_3, %c0_4] : memref<1x16xf32, #tpu.memory_space<vmem>>, vector<1x16xf32>
    %4 = vector.broadcast %3 : vector<1x16xf32> to vector<512x16xf32>
    %5 = arith.addf %2, %4 : vector<512x16xf32>
    %cst_5 = arith.constant 0.000000e+00 : f32
    %6 = vector.broadcast %cst_5 : f32 to vector<512x16xf32>
    %7 = arith.cmpf oge, %5, %6 : vector<512x16xf32>
    %cst_6 = arith.constant 2.000000e-01 : f32
    %8 = vector.broadcast %cst_6 : f32 to vector<512x16xf32>
    %9 = arith.mulf %8, %5 : vector<512x16xf32>
    %10 = arith.select %7, %5, %9 : vector<512x16xi1>, vector<512x16xf32>
    %11 = arith.truncf %10 : vector<512x16xf32> to vector<512x16xbf16>
    %c0_7 = arith.constant 0 : index
    %c0_8 = arith.constant 0 : index
    %12 = vector.load %arg4[%c0_7, %c0_8] : memref<512x16xbf16, #tpu.memory_space<vmem>>, vector<512x16xbf16>
    tpu.vector_store %arg4[%c0_7, %c0_8], %11 {strides = array<i32>} : memref<512x16xbf16, #tpu.memory_space<vmem>>, vector<512x16xbf16>,
    return
  }
  func.func @transform_0(%arg0: i32) -> (i32, i32) {
    %c0_i32 = arith.constant 0 : i32
    %c0_i32_0 = arith.constant 0 : i32
    return %arg0, %c0_i32 : i32, i32
  }
  func.func @transform_1(%arg0: i32) -> (i32, i32) {
    %c0_i32 = arith.constant 0 : i32
    %c0_i32_0 = arith.constant 0 : i32
    %c0_i32_1 = arith.constant 0 : i32
    return %c0_i32, %c0_i32_0 : i32, i32
  }
  func.func @transform_2(%arg0: i32) -> (i32, i32) {
    %c0_i32 = arith.constant 0 : i32
    %c0_i32_0 = arith.constant 0 : i32
    %c0_i32_1 = arith.constant 0 : i32
    return %c0_i32, %c0_i32_0 : i32, i32
  }
  func.func @transform_3(%arg0: i32) -> (i32, i32) {
    %c0_i32 = arith.constant 0 : i32
    %c0_i32_0 = arith.constant 0 : i32
    return %arg0, %c0_i32 : i32, i32
  }
}

</mosaic_0001>

<llo_original>
// kernel: tpu_custom_call.1
$region0: #{tpu_custom_call.1}
  #allocation0 [shape = 'u32[]', space=smem, size = 0x4, offset = 0x4, fixed_abs, tag = 'smem constant byte address 0x4 - core index']
  #allocation1 [shape = 'u32[144,128]{1,0:T(1,128)}', space=vmem, size = 0x12000, scoped, tag = 'internal scratch']
  %s0 = inlined_call_operand.vmem [shape: bf16[512,48], index: 0, kind: input, shape index: {}]
  %s1 = inlined_call_operand.vmem [shape: bf16[48,16], index: 1, kind: input, shape index: {}]
  %s2 = inlined_call_operand.vmem [shape: f32[1,16], index: 2, kind: input, shape index: {}]
  %s3 = inlined_call_operand.vmem [shape: bf16[512,16], index: 3, kind: output, shape index: {}]
  %s4 = sld [smem:[#allocation0]]
  $region22: #{tpu_custom_call.1} parent=0
    _
  %s6 = ssub.s32 1, %s4
  %s7 = scalar_select 0, %s6, %s4
  // Predicated region
  $region2: #{tpu_custom_call.1} parent=0 // pred_check
    _
  $region3: #{tpu_custom_call.1} parent=0 // pred_check_branch
    %9 = sbr.rel (0) target = $region5
  $region4: #{tpu_custom_call.1} parent=0 // pred_region
    _
  $region5: #{tpu_custom_call.1} parent=0 // pred_fallthru
    _
  // Predicated region
  $region6: #{tpu_custom_call.1} parent=0 // pred_check
    _
  $region7: #{tpu_custom_call.1} parent=0 // pred_check_branch
    %11 = sbr.rel (0) target = $region9
  $region8: #{tpu_custom_call.1} parent=0 // pred_region
    _
  $region9: #{tpu_custom_call.1} parent=0 // pred_fallthru
    _
  // Predicated region
  $region10: #{tpu_custom_call.1} parent=0 // pred_check
    _
  $region11: #{tpu_custom_call.1} parent=0 // pred_check_branch
    %13 = sbr.rel (0) target = $region13
  $region12: #{tpu_custom_call.1} parent=0 // pred_region
    _
  $region13: #{tpu_custom_call.1} parent=0 // pred_fallthru
    _
  %v15 = vld [vmem:[%s0] sm:$0xf]
  %v16 = vld [vmem:[%s0 + $0x4] sm:$0xf]
  %v17 = vld [vmem:[%s0 + $0x8] sm:$0xf]
  %v18 = vld [vmem:[%s0 + $0xc] sm:$0xf]
  %v19 = vld [vmem:[%s0 + $0x10] sm:$0xf]
  %v20 = vld [vmem:[%s0 + $0x14] sm:$0xf]
  %v21 = vld [vmem:[%s0 + $0x18] sm:$0xf]
  %v22 = vld [vmem:[%s0 + $0x1c] sm:$0xf]
  %v23 = vld [vmem:[%s0 + $0x20] sm:$0xf]
  %v24 = vld [vmem:[%s0 + $0x24] sm:$0xf]
  %v25 = vld [vmem:[%s0 + $0x28] sm:$0xf]
  %v26 = vld [vmem:[%s0 + $0x2c] sm:$0xf]
  %v27 = vld [vmem:[%s0 + $0x30] sm:$0xf]
  %v28 = vld [vmem:[%s0 + $0x34] sm:$0xf]
  %v29 = vld [vmem:[%s0 + $0x38] sm:$0xf]
  %v30 = vld [vmem:[%s0 + $0x3c] sm:$0xf]
  %v31 = vld [vmem:[%s0 + $0x40] sm:$0xf]
  %v32 = vld [vmem:[%s0 + $0x44] sm:$0xf]
  %v33 = vld [vmem:[%s0 + $0x48] sm:$0xf]
  %v34 = vld [vmem:[%s0 + $0x4c] sm:$0xf]
  %v35 = vld [vmem:[%s0 + $0x50] sm:$0xf]
  %v36 = vld [vmem:[%s0 + $0x54] sm:$0xf]
  %v37 = vld [vmem:[%s0 + $0x58] sm:$0xf]
  %v38 = vld [vmem:[%s0 + $0x5c] sm:$0xf]
  %v39 = vld [vmem:[%s0 + $0x60] sm:$0xf]
  %v40 = vld [vmem:[%s0 + $0x64] sm:$0xf]
  %v41 = vld [vmem:[%s0 + $0x68] sm:$0xf]
  %v42 = vld [vmem:[%s0 + $0x6c] sm:$0xf]
  %v43 = vld [vmem:[%s0 + $0x70] sm:$0xf]
  %v44 = vld [vmem:[%s0 + $0x74] sm:$0xf]
  %v45 = vld [vmem:[%s0 + $0x78] sm:$0xf]
  %v46 = vld [vmem:[%s0 + $0x7c] sm:$0xf]
  %v47 = vld [vmem:[%s0 + $0x80] sm:$0xf]
  %v48 = vld [vmem:[%s0 + $0x84] sm:$0xf]
  %v49 = vld [vmem:[%s0 + $0x88] sm:$0xf]
  %v50 = vld [vmem:[%s0 + $0x8c] sm:$0xf]
  %v51 = vld [vmem:[%s0 + $0x90] sm:$0xf]
  %v52 = vld [vmem:[%s0 + $0x94] sm:$0xf]
  %v53 = vld [vmem:[%s0 + $0x98] sm:$0xf]
  %v54 = vld [vmem:[%s0 + $0x9c] sm:$0xf]
  %v55 = vld [vmem:[%s0 + $0xa0] sm:$0xf]
  %v56 = vld [vmem:[%s0 + $0xa4] sm:$0xf]
  %v57 = vld [vmem:[%s0 + $0xa8] sm:$0xf]
  %v58 = vld [vmem:[%s0 + $0xac] sm:$0xf]
  %v59 = vld [vmem:[%s0 + $0xb0] sm:$0xf]
  %v60 = vld [vmem:[%s0 + $0xb4] sm:$0xf]
  %v61 = vld [vmem:[%s0 + $0xb8] sm:$0xf]
  %v62 = vld [vmem:[%s0 + $0xbc] sm:$0xf]
  %v63 = vld [vmem:[%s0 + $0xc0] sm:$0xf]
  %v64 = vld [vmem:[%s0 + $0xc4] sm:$0xf]
  %v65 = vld [vmem:[%s0 + $0xc8] sm:$0xf]
  %v66 = vld [vmem:[%s0 + $0xcc] sm:$0xf]
  %v67 = vld [vmem:[%s0 + $0xd0] sm:$0xf]
  %v68 = vld [vmem:[%s0 + $0xd4] sm:$0xf]
  %v69 = vld [vmem:[%s0 + $0xd8] sm:$0xf]
  %v70 = vld [vmem:[%s0 + $0xdc] sm:$0xf]
  %v71 = vld [vmem:[%s0 + $0xe0] sm:$0xf]
  %v72 = vld [vmem:[%s0 + $0xe4] sm:$0xf]
  %v73 = vld [vmem:[%s0 + $0xe8] sm:$0xf]
  %v74 = vld [vmem:[%s0 + $0xec] sm:$0xf]
  %v75 = vld [vmem:[%s0 + $0xf0] sm:$0xf]
  %v76 = vld [vmem:[%s0 + $0xf4] sm:$0xf]
  %v77 = vld [vmem:[%s0 + $0xf8] sm:$0xf]
  %v78 = vld [vmem:[%s0 + $0xfc] sm:$0xf]
  %v79 = vld [vmem:[%s1] sm:$0xf]
  %v80 = vld [vmem:[%s1 + $0x4] sm:$0xf]
  %v81 = vld [vmem:[%s1 + $0x8] sm:$0xf]
  %v82 = vld [vmem:[%s1 + $0xc] sm:$0xf]
  %v83 = vld [vmem:[%s1 + $0x10] sm:$0xf]
  %v84 = vld [vmem:[%s1 + $0x14] sm:$0xf]
  %v85 = vld [vmem:[%s2] sm:$0x1]
  %v87 = vlaneseq
  %v88 = vshrl.u32 %v87, 7
  %v89 = vsub.s32 0, %v88
  %v90 = vrot.slane %v85, %v89
  %v156 = vunpack.c.l.b16 %v15
  %v157 = vunpack.c.l.b16 %v16
  %v158 = vunpack.c.l.b16 %v17
  %v159 = vunpack.c.l.b16 %v18
  %v160 = vunpack.c.l.b16 %v19
  %v161 = vunpack.c.l.b16 %v20
  %v162 = vunpack.c.l.b16 %v21
  %v163 = vunpack.c.l.b16 %v22
  %v164 = vunpack.c.l.b16 %v23
  %v165 = vunpack.c.l.b16 %v24
  %v166 = vunpack.c.l.b16 %v25
  %v167 = vunpack.c.l.b16 %v26
  %v168 = vunpack.c.l.b16 %v27
  %v169 = vunpack.c.l.b16 %v28
  %v170 = vunpack.c.l.b16 %v29
  %v171 = vunpack.c.l.b16 %v30
  %v172 = vunpack.c.l.b16 %v31
  %v173 = vunpack.c.l.b16 %v32
  %v174 = vunpack.c.l.b16 %v33
  %v175 = vunpack.c.l.b16 %v34
  %v176 = vunpack.c.l.b16 %v35
  %v177 = vunpack.c.l.b16 %v36
  %v178 = vunpack.c.l.b16 %v37
  %v179 = vunpack.c.l.b16 %v38
  %v180 = vunpack.c.l.b16 %v39
  %v181 = vunpack.c.l.b16 %v40
  %v182 = vunpack.c.l.b16 %v41
  %v183 = vunpack.c.l.b16 %v42
  %v184 = vunpack.c.l.b16 %v43
  %v185 = vunpack.c.l.b16 %v44
  %v186 = vunpack.c.l.b16 %v45
  %v187 = vunpack.c.l.b16 %v46
  %v188 = vunpack.c.l.b16 %v47
  %v189 = vunpack.c.l.b16 %v48
  %v190 = vunpack.c.l.b16 %v49
  %v191 = vunpack.c.l.b16 %v50
  %v192 = vunpack.c.l.b16 %v51
  %v193 = vunpack.c.l.b16 %v52
  %v194 = vunpack.c.l.b16 %v53
  %v195 = vunpack.c.l.b16 %v54
  %v196 = vunpack.c.l.b16 %v55
  %v197 = vunpack.c.l.b16 %v56
  %v198 = vunpack.c.l.b16 %v57
  %v199 = vunpack.c.l.b16 %v58
  %v200 = vunpack.c.l.b16 %v59
  %v201 = vunpack.c.l.b16 %v60
  %v202 = vunpack.c.l.b16 %v61
  %v203 = vunpack.c.l.b16 %v62
  %v204 = vunpack.c.l.b16 %v63
  %v205 = vunpack.c.l.b16 %v64
  %v206 = vunpack.c.l.b16 %v65
  %v207 = vunpack.c.l.b16 %v66
  %v208 = vunpack.c.l.b16 %v67
  %v209 = vunpack.c.l.b16 %v68
  %v210 = vunpack.c.l.b16 %v69
  %v211 = vunpack.c.l.b16 %v70
  %v212 = vunpack.c.l.b16 %v71
  %v213 = vunpack.c.l.b16 %v72
  %v214 = vunpack.c.l.b16 %v73
  %v215 = vunpack.c.l.b16 %v74
  %v216 = vunpack.c.l.b16 %v75
  %v217 = vunpack.c.l.b16 %v76
  %v218 = vunpack.c.l.b16 %v77
  %v219 = vunpack.c.l.b16 %v78
  %v220 = vpack.c.b16 %v157, %v156
  %v221 = vpack.c.b16 %v159, %v158
  %v222 = vpack.c.b16 %v161, %v160
  %v223 = vpack.c.b16 %v163, %v162
  %v224 = vpack.c.b16 %v165, %v164
  %v225 = vpack.c.b16 %v167, %v166
  %v226 = vpack.c.b16 %v169, %v168
  %v227 = vpack.c.b16 %v171, %v170
  %v228 = vpack.c.b16 %v173, %v172
  %v229 = vpack.c.b16 %v175, %v174
  %v230 = vpack.c.b16 %v177, %v176
  %v231 = vpack.c.b16 %v179, %v178
  %v232 = vpack.c.b16 %v181, %v180
  %v233 = vpack.c.b16 %v183, %v182
  %v234 = vpack.c.b16 %v185, %v184
  %v235 = vpack.c.b16 %v187, %v186
  %v236 = vpack.c.b16 %v189, %v188
  %v237 = vpack.c.b16 %v191, %v190
  %v238 = vpack.c.b16 %v193, %v192
  %v239 = vpack.c.b16 %v195, %v194
  %v240 = vpack.c.b16 %v197, %v196
  %v241 = vpack.c.b16 %v199, %v198
  %v242 = vpack.c.b16 %v201, %v200
  %v243 = vpack.c.b16 %v203, %v202
  %v244 = vpack.c.b16 %v205, %v204
  %v245 = vpack.c.b16 %v207, %v206
  %v246 = vpack.c.b16 %v209, %v208
  %v247 = vpack.c.b16 %v211, %v210
  %v248 = vpack.c.b16 %v213, %v212
  %v249 = vpack.c.b16 %v215, %v214
  %v250 = vpack.c.b16 %v217, %v216
  %v251 = vpack.c.b16 %v219, %v218
  %v258 = vunpack.c.l.b16 %v79
  %v259 = vunpack.c.l.b16 %v80
  %v260 = vunpack.c.l.b16 %v81
  %v261 = vunpack.c.l.b16 %v82
  %v262 = vunpack.c.l.b16 %v83
  %v263 = vunpack.c.l.b16 %v84
  %v264 = vpack.c.b16 %v259, %v258
  %v265 = vpack.c.b16 %v261, %v260
  %v266 = vpack.c.b16 %v263, %v262
  %vm270 = vcmask 392192
  %v272 = vsel %vm270, %v220, 0
  %v275 = vsel %vm270, %v221, 0
  %v278 = vsel %vm270, %v222, 0
  %v281 = vsel %vm270, %v223, 0
  %v284 = vsel %vm270, %v224, 0
  %v287 = vsel %vm270, %v225, 0
  %v290 = vsel %vm270, %v226, 0
  %v293 = vsel %vm270, %v227, 0
  %v296 = vsel %vm270, %v228, 0
  %v299 = vsel %vm270, %v229, 0
  %v302 = vsel %vm270, %v230, 0
  %v305 = vsel %vm270, %v231, 0
  %v308 = vsel %vm270, %v232, 0
  %v311 = vsel %vm270, %v233, 0
  %v314 = vsel %vm270, %v234, 0
  %v317 = vsel %vm270, %v235, 0
  %v320 = vsel %vm270, %v236, 0
  %v323 = vsel %vm270, %v237, 0
  %v326 = vsel %vm270, %v238, 0
  %v329 = vsel %vm270, %v239, 0
  %v332 = vsel %vm270, %v240, 0
  %v335 = vsel %vm270, %v241, 0
  %v338 = vsel %vm270, %v242, 0
  %v341 = vsel %vm270, %v243, 0
  %v344 = vsel %vm270, %v244, 0
  %v347 = vsel %vm270, %v245, 0
  %v350 = vsel %vm270, %v246, 0
  %v353 = vsel %vm270, %v247, 0
  %v356 = vsel %vm270, %v248, 0
  %v359 = vsel %vm270, %v249, 0
  %v362 = vsel %vm270, %v250, 0
  %v365 = vsel %vm270, %v251, 0
  %367 = vmatprep.subr.bf16.mxu0 0
  %368 = vmatpush1.bf16.msra.mxu0 %v264
  %369 = vmatprep.subr.bf16.mxu0 0
  %370 = vmatpush1.bf16.msra.mxu0 %v265
  %371 = vmatprep.subr.bf16.mxu0 0
  %372 = vmatpush1.bf16.msra.mxu0 %v266
  %373 = vmatprep.subr.bf16.mxu0 0
  %374 = vmatpush1.bf16.msra.mxu0 0
  %375 = vmatprep.subr.bf16.mxu0 0
  %376 = vmatpush1.bf16.msra.mxu0 0
  %377 = vmatprep.subr.bf16.mxu0 0
  %378 = vmatpush1.bf16.msra.mxu0 0
  %379 = vmatprep.subr.bf16.mxu0 0
  %380 = vmatpush1.bf16.msra.mxu0 0
  %381 = vmatprep.subr.bf16.mxu0 0
  %382 = vmatpush1.bf16.msra.mxu0 0
  %383 = vmatprep.subr.bf16.mxu0 0
  %384 = vmatpush1.bf16.msra.mxu0 0
  %385 = vmatprep.subr.bf16.mxu0 0
  %386 = vmatpush1.bf16.msra.mxu0 0
  %387 = vmatprep.subr.bf16.mxu0 0
  %388 = vmatpush1.bf16.msra.mxu0 0
  %389 = vmatprep.subr.bf16.mxu0 0
  %390 = vmatpush1.bf16.msra.mxu0 0
  %391 = vmatprep.subr.bf16.mxu0 0
  %392 = vmatpush1.bf16.msra.mxu0 0
  %393 = vmatprep.subr.bf16.mxu0 0
  %394 = vmatpush1.bf16.msra.mxu0 0
  %395 = vmatprep.subr.bf16.mxu0 0
  %396 = vmatpush1.bf16.msra.mxu0 0
  %397 = vmatprep.subr.bf16.mxu0 0
  %398 = vmatpush1.bf16.msra.mxu0 0
  %399 = vmatprep.mubr.bf16.mxu0 0
  %400 = vmatmul.mubr.bf16.gmra.mrb[0].mxu0 %v272
  %v401 = vpop.f32.mrb[0].mxu0
  %v402 = vadd.f32 %v90, %v401
  %v403 = vpop.f32.mrb[0].mxu0
  %v404 = vpop.f32.mrb[0].mxu0
  %v405 = vadd.f32 %v90, %v404
  %v406 = vpop.f32.mrb[0].mxu0
  %407 = vmatprep.mubr.bf16.mxu0 0
  %408 = vmatmul.mubr.bf16.gmra.mrb[0].mxu0 %v275
  %v409 = vpop.f32.mrb[0].mxu0
  %v410 = vadd.f32 %v90, %v409
  %v411 = vpop.f32.mrb[0].mxu0
  %v412 = vpop.f32.mrb[0].mxu0
  %v413 = vadd.f32 %v90, %v412
  %v414 = vpop.f32.mrb[0].mxu0
  %415 = vmatprep.mubr.bf16.mxu0 0
  %416 = vmatmul.mubr.bf16.gmra.mrb[0].mxu0 %v278
  %v417 = vpop.f32.mrb[0].mxu0
  %v418 = vadd.f32 %v90, %v417
  %v419 = vpop.f32.mrb[0].mxu0
  %v420 = vpop.f32.mrb[0].mxu0
  %v421 = vadd.f32 %v90, %v420
  %v422 = vpop.f32.mrb[0].mxu0
  %423 = vmatprep.mubr.bf16.mxu0 0
  %424 = vmatmul.mubr.bf16.gmra.mrb[0].mxu0 %v281
  %v425 = vpop.f32.mrb[0].mxu0
  %v426 = vadd.f32 %v90, %v425
  %v427 = vpop.f32.mrb[0].mxu0
  %v428 = vpop.f32.mrb[0].mxu0
  %v429 = vadd.f32 %v90, %v428
  %v430 = vpop.f32.mrb[0].mxu0
  %431 = vmatprep.mubr.bf16.mxu0 0
  %432 = vmatmul.mubr.bf16.gmra.mrb[0].mxu0 %v284
  %v433 = vpop.f32.mrb[0].mxu0
  %v434 = vadd.f32 %v90, %v433
  %v435 = vpop.f32.mrb[0].mxu0
  %v436 = vpop.f32.mrb[0].mxu0
  %v437 = vadd.f32 %v90, %v436
  %v438 = vpop.f32.mrb[0].mxu0
  %439 = vmatprep.mubr.bf16.mxu0 0
  %440 = vmatmul.mubr.bf16.gmra.mrb[0].mxu0 %v287
  %v441 = vpop.f32.mrb[0].mxu0
  %v442 = vadd.f32 %v90, %v441
  %v443 = vpop.f32.mrb[0].mxu0
  %v444 = vpop.f32.mrb[0].mxu0
  %v445 = vadd.f32 %v90, %v444
  %v446 = vpop.f32.mrb[0].mxu0
  %447 = vmatprep.mubr.bf16.mxu0 0
  %448 = vmatmul.mubr.bf16.gmra.mrb[0].mxu0 %v290
  %v449 = vpop.f32.mrb[0].mxu0
  %v450 = vadd.f32 %v90, %v449
  %v451 = vpop.f32.mrb[0].mxu0
  %v452 = vpop.f32.mrb[0].mxu0
  %v453 = vadd.f32 %v90, %v452
  %v454 = vpop.f32.mrb[0].mxu0
  %455 = vmatprep.mubr.bf16.mxu0 0
  %456 = vmatmul.mubr.bf16.gmra.mrb[0].mxu0 %v293
  %v457 = vpop.f32.mrb[0].mxu0
  %v458 = vadd.f32 %v90, %v457
  %v459 = vpop.f32.mrb[0].mxu0
  %v460 = vpop.f32.mrb[0].mxu0
  %v461 = vadd.f32 %v90, %v460
  %v462 = vpop.f32.mrb[0].mxu0
  %463 = vmatprep.mubr.bf16.mxu0 0
  %464 = vmatmul.mubr.bf16.gmra.mrb[0].mxu0 %v296
  %v465 = vpop.f32.mrb[0].mxu0
  %v466 = vadd.f32 %v90, %v465
  %v467 = vpop.f32.mrb[0].mxu0
  %v468 = vpop.f32.mrb[0].mxu0
  %v469 = vadd.f32 %v90, %v468
  %v470 = vpop.f32.mrb[0].mxu0
  %471 = vmatprep.mubr.bf16.mxu0 0
  %472 = vmatmul.mubr.bf16.gmra.mrb[0].mxu0 %v299
  %v473 = vpop.f32.mrb[0].mxu0
  %v474 = vadd.f32 %v90, %v473
  %v475 = vpop.f32.mrb[0].mxu0
  %v476 = vpop.f32.mrb[0].mxu0
  %v477 = vadd.f32 %v90, %v476
  %v478 = vpop.f32.mrb[0].mxu0
  %479 = vmatprep.mubr.bf16.mxu0 0
  %480 = vmatmul.mubr.bf16.gmra.mrb[0].mxu0 %v302
  %v481 = vpop.f32.mrb[0].mxu0
  %v482 = vadd.f32 %v90, %v481
  %v483 = vpop.f32.mrb[0].mxu0
  %v484 = vpop.f32.mrb[0].mxu0
  %v485 = vadd.f32 %v90, %v484
  %v486 = vpop.f32.mrb[0].mxu0
  %487 = vmatprep.mubr.bf16.mxu0 0
  %488 = vmatmul.mubr.bf16.gmra.mrb[0].mxu0 %v305
  %v489 = vpop.f32.mrb[0].mxu0
  %v490 = vadd.f32 %v90, %v489
  %v491 = vpop.f32.mrb[0].mxu0
  %v492 = vpop.f32.mrb[0].mxu0
  %v493 = vadd.f32 %v90, %v492
  %v494 = vpop.f32.mrb[0].mxu0
  %495 = vmatprep.mubr.bf16.mxu0 0
  %496 = vmatmul.mubr.bf16.gmra.mrb[0].mxu0 %v308
  %v497 = vpop.f32.mrb[0].mxu0
  %v498 = vadd.f32 %v90, %v497
  %v499 = vpop.f32.mrb[0].mxu0
  %v500 = vpop.f32.mrb[0].mxu0
  %v501 = vadd.f32 %v90, %v500
  %v502 = vpop.f32.mrb[0].mxu0
  %503 = vmatprep.mubr.bf16.mxu0 0
  %504 = vmatmul.mubr.bf16.gmra.mrb[0].mxu0 %v311
  %v505 = vpop.f32.mrb[0].mxu0
  %v506 = vadd.f32 %v90, %v505
  %v507 = vpop.f32.mrb[0].mxu0
  %v508 = vpop.f32.mrb[0].mxu0
  %v509 = vadd.f32 %v90, %v508
  %v510 = vpop.f32.mrb[0].mxu0
  %511 = vmatprep.mubr.bf16.mxu0 0
  %512 = vmatmul.mubr.bf16.gmra.mrb[0].mxu0 %v314
  %v513 = vpop.f32.mrb[0].mxu0
  %v514 = vadd.f32 %v90, %v513
  %v515 = vpop.f32.mrb[0].mxu0
  %v516 = vpop.f32.mrb[0].mxu0
  %v517 = vadd.f32 %v90, %v516
  %v518 = vpop.f32.mrb[0].mxu0
  %519 = vmatprep.mubr.bf16.mxu0 0
  %520 = vmatmul.mubr.bf16.gmra.mrb[0].mxu0 %v317
  %v521 = vpop.f32.mrb[0].mxu0
  %v522 = vadd.f32 %v90, %v521
  %v523 = vpop.f32.mrb[0].mxu0
  %v524 = vpop.f32.mrb[0].mxu0
  %v525 = vadd.f32 %v90, %v524
  %v526 = vpop.f32.mrb[0].mxu0
  %527 = vmatprep.mubr.bf16.mxu0 0
  %528 = vmatmul.mubr.bf16.gmra.mrb[0].mxu0 %v320
  %v529 = vpop.f32.mrb[0].mxu0
  %v530 = vadd.f32 %v90, %v529
  %v531 = vpop.f32.mrb[0].mxu0
  %v532 = vpop.f32.mrb[0].mxu0
  %v533 = vadd.f32 %v90, %v532
  %v534 = vpop.f32.mrb[0].mxu0
  %535 = vmatprep.mubr.bf16.mxu0 0
  %536 = vmatmul.mubr.bf16.gmra.mrb[0].mxu0 %v323
  %v537 = vpop.f32.mrb[0].mxu0
  %v538 = vadd.f32 %v90, %v537
  %v539 = vpop.f32.mrb[0].mxu0
  %v540 = vpop.f32.mrb[0].mxu0
  %v541 = vadd.f32 %v90, %v540
  %v542 = vpop.f32.mrb[0].mxu0
  %543 = vmatprep.mubr.bf16.mxu0 0
  %544 = vmatmul.mubr.bf16.gmra.mrb[0].mxu0 %v326
  %v545 = vpop.f32.mrb[0].mxu0
  %v546 = vadd.f32 %v90, %v545
  %v547 = vpop.f32.mrb[0].mxu0
  %v548 = vpop.f32.mrb[0].mxu0
  %v549 = vadd.f32 %v90, %v548
  %v550 = vpop.f32.mrb[0].mxu0
  %551 = vmatprep.mubr.bf16.mxu0 0
  %552 = vmatmul.mubr.bf16.gmra.mrb[0].mxu0 %v329
  %v553 = vpop.f32.mrb[0].mxu0
  %v554 = vadd.f32 %v90, %v553
  %v555 = vpop.f32.mrb[0].mxu0
  %v556 = vpop.f32.mrb[0].mxu0
  %v557 = vadd.f32 %v90, %v556
  %v558 = vpop.f32.mrb[0].mxu0
  %559 = vmatprep.mubr.bf16.mxu0 0
  %560 = vmatmul.mubr.bf16.gmra.mrb[0].mxu0 %v332
  %v561 = vpop.f32.mrb[0].mxu0
  %v562 = vadd.f32 %v90, %v561
  %v563 = vpop.f32.mrb[0].mxu0
  %v564 = vpop.f32.mrb[0].mxu0
  %v565 = vadd.f32 %v90, %v564
  %v566 = vpop.f32.mrb[0].mxu0
  %567 = vmatprep.mubr.bf16.mxu0 0
  %568 = vmatmul.mubr.bf16.gmra.mrb[0].mxu0 %v335
  %v569 = vpop.f32.mrb[0].mxu0
  %v570 = vadd.f32 %v90, %v569
  %v571 = vpop.f32.mrb[0].mxu0
  %v572 = vpop.f32.mrb[0].mxu0
  %v573 = vadd.f32 %v90, %v572
  %v574 = vpop.f32.mrb[0].mxu0
  %575 = vmatprep.mubr.bf16.mxu0 0
  %576 = vmatmul.mubr.bf16.gmra.mrb[0].mxu0 %v338
  %v577 = vpop.f32.mrb[0].mxu0
  %v578 = vadd.f32 %v90, %v577
  %v579 = vpop.f32.mrb[0].mxu0
  %v580 = vpop.f32.mrb[0].mxu0
  %v581 = vadd.f32 %v90, %v580
  %v582 = vpop.f32.mrb[0].mxu0
  %583 = vmatprep.mubr.bf16.mxu0 0
  %584 = vmatmul.mubr.bf16.gmra.mrb[0].mxu0 %v341
  %v585 = vpop.f32.mrb[0].mxu0
  %v586 = vadd.f32 %v90, %v585
  %v587 = vpop.f32.mrb[0].mxu0
  %v588 = vpop.f32.mrb[0].mxu0
  %v589 = vadd.f32 %v90, %v588
  %v590 = vpop.f32.mrb[0].mxu0
  %591 = vmatprep.mubr.bf16.mxu0 0
  %592 = vmatmul.mubr.bf16.gmra.mrb[0].mxu0 %v344
  %v593 = vpop.f32.mrb[0].mxu0
  %v594 = vadd.f32 %v90, %v593
  %v595 = vpop.f32.mrb[0].mxu0
  %v596 = vpop.f32.mrb[0].mxu0
  %v597 = vadd.f32 %v90, %v596
  %v598 = vpop.f32.mrb[0].mxu0
  %599 = vmatprep.mubr.bf16.mxu0 0
  %600 = vmatmul.mubr.bf16.gmra.mrb[0].mxu0 %v347
  %v601 = vpop.f32.mrb[0].mxu0
  %v602 = vadd.f32 %v90, %v601
  %v603 = vpop.f32.mrb[0].mxu0
  %v604 = vpop.f32.mrb[0].mxu0
  %v605 = vadd.f32 %v90, %v604
  %v606 = vpop.f32.mrb[0].mxu0
  %607 = vmatprep.mubr.bf16.mxu0 0
  %608 = vmatmul.mubr.bf16.gmra.mrb[0].mxu0 %v350
  %v609 = vpop.f32.mrb[0].mxu0
  %v610 = vadd.f32 %v90, %v609
  %v611 = vpop.f32.mrb[0].mxu0
  %v612 = vpop.f32.mrb[0].mxu0
  %v613 = vadd.f32 %v90, %v612
  %v614 = vpop.f32.mrb[0].mxu0
  %615 = vmatprep.mubr.bf16.mxu0 0
  %616 = vmatmul.mubr.bf16.gmra.mrb[0].mxu0 %v353
  %v617 = vpop.f32.mrb[0].mxu0
  %v618 = vadd.f32 %v90, %v617
  %v619 = vpop.f32.mrb[0].mxu0
  %v620 = vpop.f32.mrb[0].mxu0
  %v621 = vadd.f32 %v90, %v620
  %v622 = vpop.f32.mrb[0].mxu0
  %623 = vmatprep.mubr.bf16.mxu0 0
  %624 = vmatmul.mubr.bf16.gmra.mrb[0].mxu0 %v356
  %v625 = vpop.f32.mrb[0].mxu0
  %v626 = vadd.f32 %v90, %v625
  %v627 = vpop.f32.mrb[0].mxu0
  %v628 = vpop.f32.mrb[0].mxu0
  %v629 = vadd.f32 %v90, %v628
  %v630 = vpop.f32.mrb[0].mxu0
  %631 = vmatprep.mubr.bf16.mxu0 0
  %632 = vmatmul.mubr.bf16.gmra.mrb[0].mxu0 %v359
  %v633 = vpop.f32.mrb[0].mxu0
  %v634 = vadd.f32 %v90, %v633
  %v635 = vpop.f32.mrb[0].mxu0
  %v636 = vpop.f32.mrb[0].mxu0
  %v637 = vadd.f32 %v90, %v636
  %v638 = vpop.f32.mrb[0].mxu0
  %639 = vmatprep.mubr.bf16.mxu0 0
  %640 = vmatmul.mubr.bf16.gmra.mrb[0].mxu0 %v362
  %v641 = vpop.f32.mrb[0].mxu0
  %v642 = vadd.f32 %v90, %v641
  %v643 = vpop.f32.mrb[0].mxu0
  %v644 = vpop.f32.mrb[0].mxu0
  %v645 = vadd.f32 %v90, %v644
  %v646 = vpop.f32.mrb[0].mxu0
  %647 = vmatprep.mubr.bf16.mxu0 0
  %648 = vmatmul.mubr.bf16.gmra.mrb[0].mxu0 %v365
  %v649 = vpop.f32.mrb[0].mxu0
  %v650 = vadd.f32 %v90, %v649
  %v651 = vpop.f32.mrb[0].mxu0
  %v652 = vpop.f32.mrb[0].mxu0
  %v653 = vadd.f32 %v90, %v652
  %v654 = vpop.f32.mrb[0].mxu0
  %655 = vdwg.mxu0
  %vm656 = vcmp.ge.f32.partialorder %v402, 0.0
  %vm657 = vcmp.ge.f32.partialorder %v405, 0.0
  %vm658 = vcmp.ge.f32.partialorder %v410, 0.0
  %vm659 = vcmp.ge.f32.partialorder %v413, 0.0
  %vm660 = vcmp.ge.f32.partialorder %v418, 0.0
  %vm661 = vcmp.ge.f32.partialorder %v421, 0.0
  %vm662 = vcmp.ge.f32.partialorder %v426, 0.0
  %vm663 = vcmp.ge.f32.partialorder %v429, 0.0
  %vm664 = vcmp.ge.f32.partialorder %v434, 0.0
  %vm665 = vcmp.ge.f32.partialorder %v437, 0.0
  %vm666 = vcmp.ge.f32.partialorder %v442, 0.0
  %vm667 = vcmp.ge.f32.partialorder %v445, 0.0
  %vm668 = vcmp.ge.f32.partialorder %v450, 0.0
  %vm669 = vcmp.ge.f32.partialorder %v453, 0.0
  %vm670 = vcmp.ge.f32.partialorder %v458, 0.0
  %vm671 = vcmp.ge.f32.partialorder %v461, 0.0
  %vm672 = vcmp.ge.f32.partialorder %v466, 0.0
  %vm673 = vcmp.ge.f32.partialorder %v469, 0.0
  %vm674 = vcmp.ge.f32.partialorder %v474, 0.0
  %vm675 = vcmp.ge.f32.partialorder %v477, 0.0
  %vm676 = vcmp.ge.f32.partialorder %v482, 0.0
  %vm677 = vcmp.ge.f32.partialorder %v485, 0.0
  %vm678 = vcmp.ge.f32.partialorder %v490, 0.0
  %vm679 = vcmp.ge.f32.partialorder %v493, 0.0
  %vm680 = vcmp.ge.f32.partialorder %v498, 0.0
  %vm681 = vcmp.ge.f32.partialorder %v501, 0.0
  %vm682 = vcmp.ge.f32.partialorder %v506, 0.0
  %vm683 = vcmp.ge.f32.partialorder %v509, 0.0
  %vm684 = vcmp.ge.f32.partialorder %v514, 0.0
  %vm685 = vcmp.ge.f32.partialorder %v517, 0.0
  %vm686 = vcmp.ge.f32.partialorder %v522, 0.0
  %vm687 = vcmp.ge.f32.partialorder %v525, 0.0
  %vm688 = vcmp.ge.f32.partialorder %v530, 0.0
  %vm689 = vcmp.ge.f32.partialorder %v533, 0.0
  %vm690 = vcmp.ge.f32.partialorder %v538, 0.0
  %vm691 = vcmp.ge.f32.partialorder %v541, 0.0
  %vm692 = vcmp.ge.f32.partialorder %v546, 0.0
  %vm693 = vcmp.ge.f32.partialorder %v549, 0.0
  %vm694 = vcmp.ge.f32.partialorder %v554, 0.0
  %vm695 = vcmp.ge.f32.partialorder %v557, 0.0
  %vm696 = vcmp.ge.f32.partialorder %v562, 0.0
  %vm697 = vcmp.ge.f32.partialorder %v565, 0.0
  %vm698 = vcmp.ge.f32.partialorder %v570, 0.0
  %vm699 = vcmp.ge.f32.partialorder %v573, 0.0
  %vm700 = vcmp.ge.f32.partialorder %v578, 0.0
  %vm701 = vcmp.ge.f32.partialorder %v581, 0.0
  %vm702 = vcmp.ge.f32.partialorder %v586, 0.0
  %vm703 = vcmp.ge.f32.partialorder %v589, 0.0
  %vm704 = vcmp.ge.f32.partialorder %v594, 0.0
  %vm705 = vcmp.ge.f32.partialorder %v597, 0.0
  %vm706 = vcmp.ge.f32.partialorder %v602, 0.0
  %vm707 = vcmp.ge.f32.partialorder %v605, 0.0
  %vm708 = vcmp.ge.f32.partialorder %v610, 0.0
  %vm709 = vcmp.ge.f32.partialorder %v613, 0.0
  %vm710 = vcmp.ge.f32.partialorder %v618, 0.0
  %vm711 = vcmp.ge.f32.partialorder %v621, 0.0
  %vm712 = vcmp.ge.f32.partialorder %v626, 0.0
  %vm713 = vcmp.ge.f32.partialorder %v629, 0.0
  %vm714 = vcmp.ge.f32.partialorder %v634, 0.0
  %vm715 = vcmp.ge.f32.partialorder %v637, 0.0
  %vm716 = vcmp.ge.f32.partialorder %v642, 0.0
  %vm717 = vcmp.ge.f32.partialorder %v645, 0.0
  %vm718 = vcmp.ge.f32.partialorder %v650, 0.0
  %vm719 = vcmp.ge.f32.partialorder %v653, 0.0
  %v720 = vmul.f32 %v402, 0.2
  %v721 = vmul.f32 %v405, 0.2
  %v722 = vmul.f32 %v410, 0.2
  %v723 = vmul.f32 %v413, 0.2
  %v724 = vmul.f32 %v418, 0.2
  %v725 = vmul.f32 %v421, 0.2
  %v726 = vmul.f32 %v426, 0.2
  %v727 = vmul.f32 %v429, 0.2
  %v728 = vmul.f32 %v434, 0.2
  %v729 = vmul.f32 %v437, 0.2
  %v730 = vmul.f32 %v442, 0.2
  %v731 = vmul.f32 %v445, 0.2
  %v732 = vmul.f32 %v450, 0.2
  %v733 = vmul.f32 %v453, 0.2
  %v734 = vmul.f32 %v458, 0.2
  %v735 = vmul.f32 %v461, 0.2
  %v736 = vmul.f32 %v466, 0.2
  %v737 = vmul.f32 %v469, 0.2
  %v738 = vmul.f32 %v474, 0.2
  %v739 = vmul.f32 %v477, 0.2
  %v740 = vmul.f32 %v482, 0.2
  %v741 = vmul.f32 %v485, 0.2
  %v742 = vmul.f32 %v490, 0.2
  %v743 = vmul.f32 %v493, 0.2
  %v744 = vmul.f32 %v498, 0.2
  %v745 = vmul.f32 %v501, 0.2
  %v746 = vmul.f32 %v506, 0.2
  %v747 = vmul.f32 %v509, 0.2
  %v748 = vmul.f32 %v514, 0.2
  %v749 = vmul.f32 %v517, 0.2
  %v750 = vmul.f32 %v522, 0.2
  %v751 = vmul.f32 %v525, 0.2
  %v752 = vmul.f32 %v530, 0.2
  %v753 = vmul.f32 %v533, 0.2
  %v754 = vmul.f32 %v538, 0.2
  %v755 = vmul.f32 %v541, 0.2
  %v756 = vmul.f32 %v546, 0.2
  %v757 = vmul.f32 %v549, 0.2
  %v758 = vmul.f32 %v554, 0.2
  %v759 = vmul.f32 %v557, 0.2
  %v760 = vmul.f32 %v562, 0.2
  %v761 = vmul.f32 %v565, 0.2
  %v762 = vmul.f32 %v570, 0.2
  %v763 = vmul.f32 %v573, 0.2
  %v764 = vmul.f32 %v578, 0.2
  %v765 = vmul.f32 %v581, 0.2
  %v766 = vmul.f32 %v586, 0.2
  %v767 = vmul.f32 %v589, 0.2
  %v768 = vmul.f32 %v594, 0.2
  %v769 = vmul.f32 %v597, 0.2
  %v770 = vmul.f32 %v602, 0.2
  %v771 = vmul.f32 %v605, 0.2
  %v772 = vmul.f32 %v610, 0.2
  %v773 = vmul.f32 %v613, 0.2
  %v774 = vmul.f32 %v618, 0.2
  %v775 = vmul.f32 %v621, 0.2
  %v776 = vmul.f32 %v626, 0.2
  %v777 = vmul.f32 %v629, 0.2
  %v778 = vmul.f32 %v634, 0.2
  %v779 = vmul.f32 %v637, 0.2
  %v780 = vmul.f32 %v642, 0.2
  %v781 = vmul.f32 %v645, 0.2
  %v782 = vmul.f32 %v650, 0.2
  %v783 = vmul.f32 %v653, 0.2
  %v784 = vsel %vm656, %v402, %v720
  %v785 = vsel %vm657, %v405, %v721
  %v786 = vsel %vm658, %v410, %v722
  %v787 = vsel %vm659, %v413, %v723
  %v788 = vsel %vm660, %v418, %v724
  %v789 = vsel %vm661, %v421, %v725
  %v790 = vsel %vm662, %v426, %v726
  %v791 = vsel %vm663, %v429, %v727
  %v792 = vsel %vm664, %v434, %v728
  %v793 = vsel %vm665, %v437, %v729
  %v794 = vsel %vm666, %v442, %v730
  %v795 = vsel %vm667, %v445, %v731
  %v796 = vsel %vm668, %v450, %v732
  %v797 = vsel %vm669, %v453, %v733
  %v798 = vsel %vm670, %v458, %v734
  %v799 = vsel %vm671, %v461, %v735
  %v800 = vsel %vm672, %v466, %v736
  %v801 = vsel %vm673, %v469, %v737
  %v802 = vsel %vm674, %v474, %v738
  %v803 = vsel %vm675, %v477, %v739
  %v804 = vsel %vm676, %v482, %v740
  %v805 = vsel %vm677, %v485, %v741
  %v806 = vsel %vm678, %v490, %v742
  %v807 = vsel %vm679, %v493, %v743
  %v808 = vsel %vm680, %v498, %v744
  %v809 = vsel %vm681, %v501, %v745
  %v810 = vsel %vm682, %v506, %v746
  %v811 = vsel %vm683, %v509, %v747
  %v812 = vsel %vm684, %v514, %v748
  %v813 = vsel %vm685, %v517, %v749
  %v814 = vsel %vm686, %v522, %v750
  %v815 = vsel %vm687, %v525, %v751
  %v816 = vsel %vm688, %v530, %v752
  %v817 = vsel %vm689, %v533, %v753
  %v818 = vsel %vm690, %v538, %v754
  %v819 = vsel %vm691, %v541, %v755
  %v820 = vsel %vm692, %v546, %v756
  %v821 = vsel %vm693, %v549, %v757
  %v822 = vsel %vm694, %v554, %v758
  %v823 = vsel %vm695, %v557, %v759
  %v824 = vsel %vm696, %v562, %v760
  %v825 = vsel %vm697, %v565, %v761
  %v826 = vsel %vm698, %v570, %v762
  %v827 = vsel %vm699, %v573, %v763
  %v828 = vsel %vm700, %v578, %v764
  %v829 = vsel %vm701, %v581, %v765
  %v830 = vsel %vm702, %v586, %v766
  %v831 = vsel %vm703, %v589, %v767
  %v832 = vsel %vm704, %v594, %v768
  %v833 = vsel %vm705, %v597, %v769
  %v834 = vsel %vm706, %v602, %v770
  %v835 = vsel %vm707, %v605, %v771
  %v836 = vsel %vm708, %v610, %v772
  %v837 = vsel %vm709, %v613, %v773
  %v838 = vsel %vm710, %v618, %v774
  %v839 = vsel %vm711, %v621, %v775
  %v840 = vsel %vm712, %v626, %v776
  %v841 = vsel %vm713, %v629, %v777
  %v842 = vsel %vm714, %v634, %v778
  %v843 = vsel %vm715, %v637, %v779
  %v844 = vsel %vm716, %v642, %v780
  %v845 = vsel %vm717, %v645, %v781
  %v846 = vsel %vm718, %v650, %v782
  %v847 = vsel %vm719, %v653, %v783
  %v848 = vpack.c.bf16 %v785, %v784
  %v849 = vpack.c.bf16 %v787, %v786
  %v850 = vpack.c.bf16 %v789, %v788
  %v851 = vpack.c.bf16 %v791, %v790
  %v852 = vpack.c.bf16 %v793, %v792
  %v853 = vpack.c.bf16 %v795, %v794
  %v854 = vpack.c.bf16 %v797, %v796
  %v855 = vpack.c.bf16 %v799, %v798
  %v856 = vpack.c.bf16 %v801, %v800
  %v857 = vpack.c.bf16 %v803, %v802
  %v858 = vpack.c.bf16 %v805, %v804
  %v859 = vpack.c.bf16 %v807, %v806
  %v860 = vpack.c.bf16 %v809, %v808
  %v861 = vpack.c.bf16 %v811, %v810
  %v862 = vpack.c.bf16 %v813, %v812
  %v863 = vpack.c.bf16 %v815, %v814
  %v864 = vpack.c.bf16 %v817, %v816
  %v865 = vpack.c.bf16 %v819, %v818
  %v866 = vpack.c.bf16 %v821, %v820
  %v867 = vpack.c.bf16 %v823, %v822
  %v868 = vpack.c.bf16 %v825, %v824
  %v869 = vpack.c.bf16 %v827, %v826
  %v870 = vpack.c.bf16 %v829, %v828
  %v871 = vpack.c.bf16 %v831, %v830
  %v872 = vpack.c.bf16 %v833, %v832
  %v873 = vpack.c.bf16 %v835, %v834
  %v874 = vpack.c.bf16 %v837, %v836
  %v875 = vpack.c.bf16 %v839, %v838
  %v876 = vpack.c.bf16 %v841, %v840
  %v877 = vpack.c.bf16 %v843, %v842
  %v878 = vpack.c.bf16 %v845, %v844
  %v879 = vpack.c.bf16 %v847, %v846
  %v912 = vunpack.c.l.b16 %v848
  %v913 = vunpack.c.h.b16 %v848
  %v914 = vunpack.c.l.b16 %v849
  %v915 = vunpack.c.h.b16 %v849
  %v916 = vunpack.c.l.b16 %v850
  %v917 = vunpack.c.h.b16 %v850
  %v918 = vunpack.c.l.b16 %v851
  %v919 = vunpack.c.h.b16 %v851
  %v920 = vunpack.c.l.b16 %v852
  %v921 = vunpack.c.h.b16 %v852
  %v922 = vunpack.c.l.b16 %v853
  %v923 = vunpack.c.h.b16 %v853
  %v924 = vunpack.c.l.b16 %v854
  %v925 = vunpack.c.h.b16 %v854
  %v926 = vunpack.c.l.b16 %v855
  %v927 = vunpack.c.h.b16 %v855
  %v928 = vunpack.c.l.b16 %v856
  %v929 = vunpack.c.h.b16 %v856
  %v930 = vunpack.c.l.b16 %v857
  %v931 = vunpack.c.h.b16 %v857
  %v932 = vunpack.c.l.b16 %v858
  %v933 = vunpack.c.h.b16 %v858
  %v934 = vunpack.c.l.b16 %v859
  %v935 = vunpack.c.h.b16 %v859
  %v936 = vunpack.c.l.b16 %v860
  %v937 = vunpack.c.h.b16 %v860
  %v938 = vunpack.c.l.b16 %v861
  %v939 = vunpack.c.h.b16 %v861
  %v940 = vunpack.c.l.b16 %v862
  %v941 = vunpack.c.h.b16 %v862
  %v942 = vunpack.c.l.b16 %v863
  %v943 = vunpack.c.h.b16 %v863
  %v944 = vunpack.c.l.b16 %v864
  %v945 = vunpack.c.h.b16 %v864
  %v946 = vunpack.c.l.b16 %v865
  %v947 = vunpack.c.h.b16 %v865
  %v948 = vunpack.c.l.b16 %v866
  %v949 = vunpack.c.h.b16 %v866
  %v950 = vunpack.c.l.b16 %v867
  %v951 = vunpack.c.h.b16 %v867
  %v952 = vunpack.c.l.b16 %v868
  %v953 = vunpack.c.h.b16 %v868
  %v954 = vunpack.c.l.b16 %v869
  %v955 = vunpack.c.h.b16 %v869
  %v956 = vunpack.c.l.b16 %v870
  %v957 = vunpack.c.h.b16 %v870
  %v958 = vunpack.c.l.b16 %v871
  %v959 = vunpack.c.h.b16 %v871
  %v960 = vunpack.c.l.b16 %v872
  %v961 = vunpack.c.h.b16 %v872
  %v962 = vunpack.c.l.b16 %v873
  %v963 = vunpack.c.h.b16 %v873
  %v964 = vunpack.c.l.b16 %v874
  %v965 = vunpack.c.h.b16 %v874
  %v966 = vunpack.c.l.b16 %v875
  %v967 = vunpack.c.h.b16 %v875
  %v968 = vunpack.c.l.b16 %v876
  %v969 = vunpack.c.h.b16 %v876
  %v970 = vunpack.c.l.b16 %v877
  %v971 = vunpack.c.h.b16 %v877
  %v972 = vunpack.c.l.b16 %v878
  %v973 = vunpack.c.h.b16 %v878
  %v974 = vunpack.c.l.b16 %v879
  %v975 = vunpack.c.h.b16 %v879
  %v976 = vpack.c.b16 %v912, %v912
  %v977 = vpack.c.b16 %v913, %v913
  %v978 = vpack.c.b16 %v914, %v914
  %v979 = vpack.c.b16 %v915, %v915
  %v980 = vpack.c.b16 %v916, %v916
  %v981 = vpack.c.b16 %v917, %v917
  %v982 = vpack.c.b16 %v918, %v918
  %v983 = vpack.c.b16 %v919, %v919
  %v984 = vpack.c.b16 %v920, %v920
  %v985 = vpack.c.b16 %v921, %v921
  %v986 = vpack.c.b16 %v922, %v922
  %v987 = vpack.c.b16 %v923, %v923
  %v988 = vpack.c.b16 %v924, %v924
  %v989 = vpack.c.b16 %v925, %v925
  %v990 = vpack.c.b16 %v926, %v926
  %v991 = vpack.c.b16 %v927, %v927
  %v992 = vpack.c.b16 %v928, %v928
  %v993 = vpack.c.b16 %v929, %v929
  %v994 = vpack.c.b16 %v930, %v930
  %v995 = vpack.c.b16 %v931, %v931
  %v996 = vpack.c.b16 %v932, %v932
  %v997 = vpack.c.b16 %v933, %v933
  %v998 = vpack.c.b16 %v934, %v934
  %v999 = vpack.c.b16 %v935, %v935
  %v1000 = vpack.c.b16 %v936, %v936
  %v1001 = vpack.c.b16 %v937, %v937
  %v1002 = vpack.c.b16 %v938, %v938
  %v1003 = vpack.c.b16 %v939, %v939
  %v1004 = vpack.c.b16 %v940, %v940
  %v1005 = vpack.c.b16 %v941, %v941
  %v1006 = vpack.c.b16 %v942, %v942
  %v1007 = vpack.c.b16 %v943, %v943
  %v1008 = vpack.c.b16 %v944, %v944
  %v1009 = vpack.c.b16 %v945, %v945
  %v1010 = vpack.c.b16 %v946, %v946
  %v1011 = vpack.c.b16 %v947, %v947
  %v1012 = vpack.c.b16 %v948, %v948
  %v1013 = vpack.c.b16 %v949, %v949
  %v1014 = vpack.c.b16 %v950, %v950
  %v1015 = vpack.c.b16 %v951, %v951
  %v1016 = vpack.c.b16 %v952, %v952
  %v1017 = vpack.c.b16 %v953, %v953
  %v1018 = vpack.c.b16 %v954, %v954
  %v1019 = vpack.c.b16 %v955, %v955
  %v1020 = vpack.c.b16 %v956, %v956
  %v1021 = vpack.c.b16 %v957, %v957
  %v1022 = vpack.c.b16 %v958, %v958
  %v1023 = vpack.c.b16 %v959, %v959
  %v1024 = vpack.c.b16 %v960, %v960
  %v1025 = vpack.c.b16 %v961, %v961
  %v1026 = vpack.c.b16 %v962, %v962
  %v1027 = vpack.c.b16 %v963, %v963
  %v1028 = vpack.c.b16 %v964, %v964
  %v1029 = vpack.c.b16 %v965, %v965
  %v1030 = vpack.c.b16 %v966, %v966
  %v1031 = vpack.c.b16 %v967, %v967
  %v1032 = vpack.c.b16 %v968, %v968
  %v1033 = vpack.c.b16 %v969, %v969
  %v1034 = vpack.c.b16 %v970, %v970
  %v1035 = vpack.c.b16 %v971, %v971
  %v1036 = vpack.c.b16 %v972, %v972
  %v1037 = vpack.c.b16 %v973, %v973
  %v1038 = vpack.c.b16 %v974, %v974
  %v1039 = vpack.c.b16 %v975, %v975
  %vm1104 = vcmask 125952
  %1105 = vst.msk [vmem:[%s3] sm:$0xf] %vm1104, %v976
  %1106 = vst.msk [vmem:[%s3 + $0x4] sm:$0xf] %vm1104, %v977
  %1107 = vst.msk [vmem:[%s3 + $0x8] sm:$0xf] %vm1104, %v978
  %1108 = vst.msk [vmem:[%s3 + $0xc] sm:$0xf] %vm1104, %v979
  %1109 = vst.msk [vmem:[%s3 + $0x10] sm:$0xf] %vm1104, %v980
  %1110 = vst.msk [vmem:[%s3 + $0x14] sm:$0xf] %vm1104, %v981
  %1111 = vst.msk [vmem:[%s3 + $0x18] sm:$0xf] %vm1104, %v982
  %1112 = vst.msk [vmem:[%s3 + $0x1c] sm:$0xf] %vm1104, %v983
  %1113 = vst.msk [vmem:[%s3 + $0x20] sm:$0xf] %vm1104, %v984
  %1114 = vst.msk [vmem:[%s3 + $0x24] sm:$0xf] %vm1104, %v985
  %1115 = vst.msk [vmem:[%s3 + $0x28] sm:$0xf] %vm1104, %v986
  %1116 = vst.msk [vmem:[%s3 + $0x2c] sm:$0xf] %vm1104, %v987
  %1117 = vst.msk [vmem:[%s3 + $0x30] sm:$0xf] %vm1104, %v988
  %1118 = vst.msk [vmem:[%s3 + $0x34] sm:$0xf] %vm1104, %v989
  %1119 = vst.msk [vmem:[%s3 + $0x38] sm:$0xf] %vm1104, %v990
  %1120 = vst.msk [vmem:[%s3 + $0x3c] sm:$0xf] %vm1104, %v991
  %1121 = vst.msk [vmem:[%s3 + $0x40] sm:$0xf] %vm1104, %v992
  %1122 = vst.msk [vmem:[%s3 + $0x44] sm:$0xf] %vm1104, %v993
  %1123 = vst.msk [vmem:[%s3 + $0x48] sm:$0xf] %vm1104, %v994
  %1124 = vst.msk [vmem:[%s3 + $0x4c] sm:$0xf] %vm1104, %v995
  %1125 = vst.msk [vmem:[%s3 + $0x50] sm:$0xf] %vm1104, %v996
  %1126 = vst.msk [vmem:[%s3 + $0x54] sm:$0xf] %vm1104, %v997
  %1127 = vst.msk [vmem:[%s3 + $0x58] sm:$0xf] %vm1104, %v998
  %1128 = vst.msk [vmem:[%s3 + $0x5c] sm:$0xf] %vm1104, %v999
  %1129 = vst.msk [vmem:[%s3 + $0x60] sm:$0xf] %vm1104, %v1000
  %1130 = vst.msk [vmem:[%s3 + $0x64] sm:$0xf] %vm1104, %v1001
  %1131 = vst.msk [vmem:[%s3 + $0x68] sm:$0xf] %vm1104, %v1002
  %1132 = vst.msk [vmem:[%s3 + $0x6c] sm:$0xf] %vm1104, %v1003
  %1133 = vst.msk [vmem:[%s3 + $0x70] sm:$0xf] %vm1104, %v1004
  %1134 = vst.msk [vmem:[%s3 + $0x74] sm:$0xf] %vm1104, %v1005
  %1135 = vst.msk [vmem:[%s3 + $0x78] sm:$0xf] %vm1104, %v1006
  %1136 = vst.msk [vmem:[%s3 + $0x7c] sm:$0xf] %vm1104, %v1007
  %1137 = vst.msk [vmem:[%s3 + $0x80] sm:$0xf] %vm1104, %v1008
  %1138 = vst.msk [vmem:[%s3 + $0x84] sm:$0xf] %vm1104, %v1009
  %1139 = vst.msk [vmem:[%s3 + $0x88] sm:$0xf] %vm1104, %v1010
  %1140 = vst.msk [vmem:[%s3 + $0x8c] sm:$0xf] %vm1104, %v1011
  %1141 = vst.msk [vmem:[%s3 + $0x90] sm:$0xf] %vm1104, %v1012
  %1142 = vst.msk [vmem:[%s3 + $0x94] sm:$0xf] %vm1104, %v1013
  %1143 = vst.msk [vmem:[%s3 + $0x98] sm:$0xf] %vm1104, %v1014
  %1144 = vst.msk [vmem:[%s3 + $0x9c] sm:$0xf] %vm1104, %v1015
  %1145 = vst.msk [vmem:[%s3 + $0xa0] sm:$0xf] %vm1104, %v1016
  %1146 = vst.msk [vmem:[%s3 + $0xa4] sm:$0xf] %vm1104, %v1017
  %1147 = vst.msk [vmem:[%s3 + $0xa8] sm:$0xf] %vm1104, %v1018
  %1148 = vst.msk [vmem:[%s3 + $0xac] sm:$0xf] %vm1104, %v1019
  %1149 = vst.msk [vmem:[%s3 + $0xb0] sm:$0xf] %vm1104, %v1020
  %1150 = vst.msk [vmem:[%s3 + $0xb4] sm:$0xf] %vm1104, %v1021
  %1151 = vst.msk [vmem:[%s3 + $0xb8] sm:$0xf] %vm1104, %v1022
  %1152 = vst.msk [vmem:[%s3 + $0xbc] sm:$0xf] %vm1104, %v1023
  %1153 = vst.msk [vmem:[%s3 + $0xc0] sm:$0xf] %vm1104, %v1024
  %1154 = vst.msk [vmem:[%s3 + $0xc4] sm:$0xf] %vm1104, %v1025
  %1155 = vst.msk [vmem:[%s3 + $0xc8] sm:$0xf] %vm1104, %v1026
  %1156 = vst.msk [vmem:[%s3 + $0xcc] sm:$0xf] %vm1104, %v1027
  %1157 = vst.msk [vmem:[%s3 + $0xd0] sm:$0xf] %vm1104, %v1028
  %1158 = vst.msk [vmem:[%s3 + $0xd4] sm:$0xf] %vm1104, %v1029
  %1159 = vst.msk [vmem:[%s3 + $0xd8] sm:$0xf] %vm1104, %v1030
  %1160 = vst.msk [vmem:[%s3 + $0xdc] sm:$0xf] %vm1104, %v1031
  %1161 = vst.msk [vmem:[%s3 + $0xe0] sm:$0xf] %vm1104, %v1032
  %1162 = vst.msk [vmem:[%s3 + $0xe4] sm:$0xf] %vm1104, %v1033
  %1163 = vst.msk [vmem:[%s3 + $0xe8] sm:$0xf] %vm1104, %v1034
  %1164 = vst.msk [vmem:[%s3 + $0xec] sm:$0xf] %vm1104, %v1035
  %1165 = vst.msk [vmem:[%s3 + $0xf0] sm:$0xf] %vm1104, %v1036
  %1166 = vst.msk [vmem:[%s3 + $0xf4] sm:$0xf] %vm1104, %v1037
  %1167 = vst.msk [vmem:[%s3 + $0xf8] sm:$0xf] %vm1104, %v1038
  %1168 = vst.msk [vmem:[%s3 + $0xfc] sm:$0xf] %vm1104, %v1039
  // Predicated region
  $region14: #{tpu_custom_call.1} parent=0 // pred_check
    _
  $region15: #{tpu_custom_call.1} parent=0 // pred_check_branch
    %1170 = sbr.rel (0) target = $region17
  $region16: #{tpu_custom_call.1} parent=0 // pred_region
    _
  $region17: #{tpu_custom_call.1} parent=0 // pred_fallthru
    _
  // Predicated region
  $region18: #{tpu_custom_call.1} parent=0 // pred_check
    _
  $region19: #{tpu_custom_call.1} parent=0 // pred_check_branch
    %1172 = sbr.rel (0) target = $region21
  $region20: #{tpu_custom_call.1} parent=0 // pred_region
    _
  $region21: #{tpu_custom_call.1} parent=0 // pred_fallthru
    _

</llo_original>
